<compile_context>
chip_gen: v6e
topology: v6e:2x2x1
jax: 0.10.0
libtpu: 0.0.40
codegen_flags: <defaults>
</compile_context>

<pallas_src>
import jax
import jax.numpy as jnp
from jax.experimental import pallas as pl
from jax.experimental.pallas import tpu as pltpu

_LANES = 128
_MAX_BLOCK_ROWS = 2048  # 2048 * 128 * 4B = 1 MiB per f32 input block


def _cdiv(a, b):
    return -(-a // b)


def _round_up(a, b):
    return _cdiv(a, b) * b


def _loss2_kernel(p1_ref, p2_ref, l1_ref, l2_ref, out_ref):
    i = pl.program_id(1)

    @pl.when(i == 0)
    def _init():
        out_ref[...] = jnp.zeros_like(out_ref)

    # Fuse the four tiles with elementwise adds (VPU has slack in a mem-bound
    # kernel) and do a single sublane reduction per step.
    total = (
        p1_ref[...].astype(jnp.float32)
        + p2_ref[...].astype(jnp.float32)
        + l1_ref[...].astype(jnp.float32)
        + l2_ref[...].astype(jnp.float32)
    )
    out_ref[0:1, :] += jnp.sum(total, axis=0, keepdims=True)


def _working_dtype(*xs):
    # Keep bf16 in HBM if every input is bf16 (halves DMA traffic); otherwise f32.
    if all(x.dtype == jnp.bfloat16 for x in xs):
        return jnp.bfloat16
    return jnp.float32


def _choose_tiling(max_elems, sublanes):
    rows = _round_up(_cdiv(max_elems, _LANES), sublanes)
    n_tiles = max(1, _cdiv(rows, _MAX_BLOCK_ROWS))
    # Split across the two TensorCores (v7x) only when there is enough work;
    # on v5e/v6e the "parallel" axis just runs sequentially.
    n_split = 2 if n_tiles >= 2 else 1
    n_tiles = _round_up(n_tiles, n_split)
    block_rows = _round_up(_cdiv(rows, n_tiles), sublanes)
    padded_rows = n_tiles * block_rows
    return padded_rows, block_rows, n_split, n_tiles // n_split


def _prep(x, dtype, padded_rows):
    flat = jnp.ravel(x)  # free view for contiguous inputs
    if flat.dtype != dtype:
        flat = flat.astype(dtype)
    pad = padded_rows * _LANES - flat.shape[0]
    if pad:  # only materialize a padded copy when the size is ragged
        flat = jnp.pad(flat, (0, pad))
    return flat.reshape(padded_rows, _LANES)


def loss2(prediction1, prediction2, label1, label2):
    """Pallas implementation of Loss2.forward. Returns a scalar float32."""
    denom = 4.0 * float(prediction1.size)

    dtype = _working_dtype(prediction1, prediction2, label1, label2)
    sublanes = 8 if dtype == jnp.float32 else 16

    max_elems = max(x.size for x in (prediction1, prediction2, label1, label2))
    padded_rows, block_rows, n_split, tiles_per_split = _choose_tiling(
        max_elems, sublanes
    )

    inputs = [
        _prep(x, dtype, padded_rows)
        for x in (prediction1, prediction2, label1, label2)
    ]

    in_spec = pl.BlockSpec(
        (block_rows, _LANES), lambda s, i: (s * tiles_per_split + i, 0)
    )
    out_spec = pl.BlockSpec((8, _LANES), lambda s, i: (s, 0))

    partial = pl.pallas_call(
        _loss2_kernel,
        out_shape=jax.ShapeDtypeStruct((n_split * 8, _LANES), jnp.float32),
        grid_spec=pltpu.PrefetchScalarGridSpec(
            num_scalar_prefetch=0,
            grid=(n_split, tiles_per_split),
            in_specs=[in_spec, in_spec, in_spec, in_spec],
            out_specs=out_spec,
        ),
        compiler_params=pltpu.CompilerParams(
            dimension_semantics=("parallel", "arbitrary")
        ),
    )(*inputs)

    # Final tiny reduction + divide in plain JAX (negligible cost).
    return jnp.sum(partial) / jnp.float32(denom)


if __name__ == "__main__":
    key = jax.random.PRNGKey(0)
    k1, k2, k3, k4 = jax.random.split(key, 4)

    # Small NCHW-like prediction/label pairs.
    p1 = jax.random.normal(k1, (2, 4, 16, 16), dtype=jnp.float32)
    p2 = jax.random.normal(k2, (2, 4, 16, 16), dtype=jnp.float32)
    l1 = jax.random.normal(k3, (2, 4, 16, 16), dtype=jnp.float32)
    l2 = jax.random.normal(k4, (2, 4, 16, 16), dtype=jnp.float32)

    result = loss2(p1, p2, l1, l2)
    result = jax.block_until_ready(result)

    # Reference check in plain JAX (same math as the PyTorch module).
    ref = (jnp.sum(p1) + jnp.sum(p2) + jnp.sum(l1) + jnp.sum(l2)) / (4 * p1.size)
    assert jnp.allclose(result, ref, rtol=1e-5, atol=1e-5), (result, ref)

    print("KERNEL_OK")
</pallas_src>

<mosaic_0001>
module attributes {stable_mosaic.version = 11 : i64} {
  func.func @_loss2_kernel(%arg0: i32, %arg1: i32, %arg2: memref<16x128xf32, #tpu.memory_space<vmem>>, %arg3: memref<16x128xf32, #tpu.memory_space<vmem>>, %arg4: memref<16x128xf32, #tpu.memory_space<vmem>>, %arg5: memref<16x128xf32, #tpu.memory_space<vmem>>, %arg6: memref<8x128xf32, #tpu.memory_space<vmem>>) attributes {dimension_semantics = [#tpu.dimension_semantics<parallel>, #tpu.dimension_semantics<arbitrary>], iteration_bounds = array<i64: 1, 1>, scalar_prefetch = 0 : i64, scratch_operands = 0 : i64, tpu.core_type = #tpu.core_type<tc>, window_params = [{transform_indices = @transform_0, window_bounds = array<i64: 16, 128>}, {transform_indices = @transform_1, window_bounds = array<i64: 16, 128>}, {transform_indices = @transform_2, window_bounds = array<i64: 16, 128>}, {transform_indices = @transform_3, window_bounds = array<i64: 16, 128>}, {transform_indices = @transform_4, window_bounds = array<i64: 8, 128>}]} {
    %c0_i32 = arith.constant 0 : i32
    %0 = arith.cmpi eq, %arg1, %c0_i32 : i32
    %1 = arith.extui %0 : i1 to i32
    %c0_i32_0 = arith.constant 0 : i32
    %2 = arith.cmpi ne, %1, %c0_i32_0 : i32
    scf.if %2 {
      %cst_12 = arith.constant 0.000000e+00 : f32
      %15 = vector.broadcast %cst_12 : f32 to vector<8x128xf32>
      %c0_13 = arith.constant 0 : index
      %c0_14 = arith.constant 0 : index
      %16 = vector.load %arg6[%c0_13, %c0_14] : memref<8x128xf32, #tpu.memory_space<vmem>>, vector<8x128xf32>
      tpu.vector_store %arg6[%c0_13, %c0_14], %15 {strides = array<i32>} : memref<8x128xf32, #tpu.memory_space<vmem>>, vector<8x128xf32>,
    } else {
    }
    %c0 = arith.constant 0 : index
    %c0_1 = arith.constant 0 : index
    %3 = vector.load %arg2[%c0, %c0_1] : memref<16x128xf32, #tpu.memory_space<vmem>>, vector<16x128xf32>
    %c0_2 = arith.constant 0 : index
    %c0_3 = arith.constant 0 : index
    %4 = vector.load %arg3[%c0_2, %c0_3] : memref<16x128xf32, #tpu.memory_space<vmem>>, vector<16x128xf32>
    %5 = arith.addf %3, %4 : vector<16x128xf32>
    %c0_4 = arith.constant 0 : index
    %c0_5 = arith.constant 0 : index
    %6 = vector.load %arg4[%c0_4, %c0_5] : memref<16x128xf32, #tpu.memory_space<vmem>>, vector<16x128xf32>
    %7 = arith.addf %5, %6 : vector<16x128xf32>
    %c0_6 = arith.constant 0 : index
    %c0_7 = arith.constant 0 : index
    %8 = vector.load %arg5[%c0_6, %c0_7] : memref<16x128xf32, #tpu.memory_space<vmem>>, vector<16x128xf32>
    %9 = arith.addf %7, %8 : vector<16x128xf32>
    %c0_8 = arith.constant 0 : index
    %c0_9 = arith.constant 0 : index
    %10 = vector.load %arg6[%c0_8, %c0_9] : memref<8x128xf32, #tpu.memory_space<vmem>>, vector<1x128xf32>
    %cst = arith.constant dense<0.000000e+00> : vector<128xf32>
    %11 = vector.multi_reduction <add>, %9, %cst [0] : vector<16x128xf32> to vector<128xf32>
    %12 = vector.shape_cast %11 : vector<128xf32> to vector<1x128xf32>
    %13 = arith.addf %10, %12 : vector<1x128xf32>
    %c0_10 = arith.constant 0 : index
    %c0_11 = arith.constant 0 : index
    %14 = vector.load %arg6[%c0_10, %c0_11] : memref<8x128xf32, #tpu.memory_space<vmem>>, vector<1x128xf32>
    tpu.vector_store %arg6[%c0_10, %c0_11], %13 {strides = array<i32>} : memref<8x128xf32, #tpu.memory_space<vmem>>, vector<1x128xf32>,
    return
  }
  func.func @transform_0(%arg0: i32, %arg1: i32) -> (i32, i32) {
    %c1_i32 = arith.constant 1 : i32
    %0 = arith.muli %arg0, %c1_i32 : i32
    %1 = arith.addi %0, %arg1 : i32
    %c0_i32 = arith.constant 0 : i32
    %c0_i32_0 = arith.constant 0 : i32
    return %1, %c0_i32 : i32, i32
  }
  func.func @transform_1(%arg0: i32, %arg1: i32) -> (i32, i32) {
    %c1_i32 = arith.constant 1 : i32
    %0 = arith.muli %arg0, %c1_i32 : i32
    %1 = arith.addi %0, %arg1 : i32
    %c0_i32 = arith.constant 0 : i32
    %c0_i32_0 = arith.constant 0 : i32
    return %1, %c0_i32 : i32, i32
  }
  func.func @transform_2(%arg0: i32, %arg1: i32) -> (i32, i32) {
    %c1_i32 = arith.constant 1 : i32
    %0 = arith.muli %arg0, %c1_i32 : i32
    %1 = arith.addi %0, %arg1 : i32
    %c0_i32 = arith.constant 0 : i32
    %c0_i32_0 = arith.constant 0 : i32
    return %1, %c0_i32 : i32, i32
  }
  func.func @transform_3(%arg0: i32, %arg1: i32) -> (i32, i32) {
    %c1_i32 = arith.constant 1 : i32
    %0 = arith.muli %arg0, %c1_i32 : i32
    %1 = arith.addi %0, %arg1 : i32
    %c0_i32 = arith.constant 0 : i32
    %c0_i32_0 = arith.constant 0 : i32
    return %1, %c0_i32 : i32, i32
  }
  func.func @transform_4(%arg0: i32, %arg1: i32) -> (i32, i32) {
    %c0_i32 = arith.constant 0 : i32
    %c0_i32_0 = arith.constant 0 : i32
    return %arg0, %c0_i32 : i32, i32
  }
}

</mosaic_0001>

<llo_original>
// kernel: tpu_custom_call.1
$region0: #{tpu_custom_call.1}
  #allocation0 [shape = 'u32[]', space=smem, size = 0x4, offset = 0x4, fixed_abs, tag = 'smem constant byte address 0x4 - core index']
  #allocation1 [shape = 'u32[144,128]{1,0:T(1,128)}', space=vmem, size = 0x12000, scoped, tag = 'internal scratch']
  %s0 = inlined_call_operand.hbm [shape: f32[16,128], index: 0, kind: input, shape index: {}]
  %s1 = inlined_call_operand.hbm [shape: f32[16,128], index: 1, kind: input, shape index: {}]
  %s2 = inlined_call_operand.hbm [shape: f32[16,128], index: 2, kind: input, shape index: {}]
  %s3 = inlined_call_operand.hbm [shape: f32[16,128], index: 3, kind: input, shape index: {}]
  %s4 = inlined_call_operand.hbm [shape: f32[8,128], index: 4, kind: output, shape index: {}]
  %s5 = sld [smem:[#allocation0]]
  $region46: #{tpu_custom_call.1} parent=0
    _
  %s7 = ssub.s32 1, %s5
  %s8 = scalar_select 0, %s7, %s5
  $region1: #{tpu_custom_call.1} parent=0
    #allocation2 [shape = 'u8[8192]{0}', space=vmem, size = 0x2000, scoped, tag = 'input window, operand 0, single buffered']
    #allocation3 [shape = 's32[1]{0}', space=sflag, size = 0x4, scoped, tag = 'scoped memory for tpu_custom_call.1']
    #allocation4 [shape = 's32[1]{0}', space=sflag, size = 0x4, scoped, tag = 'scoped memory for tpu_custom_call.1']
    #allocation5 [shape = 'u8[8192]{0}', space=vmem, size = 0x2000, scoped, tag = 'input window, operand 1, single buffered']
    #allocation6 [shape = 's32[1]{0}', space=sflag, size = 0x4, scoped, tag = 'scoped memory for tpu_custom_call.1']
    #allocation7 [shape = 'u8[8192]{0}', space=vmem, size = 0x2000, scoped, tag = 'input window, operand 2, single buffered']
    #allocation8 [shape = 'u8[8192]{0}', space=vmem, size = 0x2000, scoped, tag = 'input window, operand 3, single buffered']
    #allocation9 [shape = 's32[1]{0}', space=sflag, size = 0x4, scoped, tag = 'scoped memory for tpu_custom_call.1']
    #allocation10 [shape = 'u8[4096]{0}', space=vmem, size = 0x1000, scoped, tag = 'output window, operand 0, single buffered']
    %9 = vsyncpa [#allocation3], 0
    %10 = vsyncpa [#allocation6], 0
    %11 = vsyncpa [#allocation9], 0
    %12 = vsyncpa [#allocation4], 0
    // Predicated region
    $region2: #{tpu_custom_call.1} parent=1 // pred_check
      _
    $region3: #{tpu_custom_call.1} parent=1 // pred_check_branch
      %14 = sbr.rel (0) target = $region5
    $region4: #{tpu_custom_call.1} parent=1 // pred_region
      %s15 = sadd.s32 0, 0
      %s16 = smul.u32 2, %s15
      %s18 = ssub.s32 256, 256
      %19 = vsyncadd [#allocation3], %s18
      %s20 = smul.addr %s16, 128
      %s21 = scalar_lea.hbm %s0, %s20
      %s22 = sshll.u32 [#allocation2], 4
      %s23 = int_to_ptr.vmem [resolvable:$true] %s22
      %28 = dma.hbm_to_vmem [thread:$0]  %s21, 256, %s23, [#allocation3], 128, 128, 8
    $region5: #{tpu_custom_call.1} parent=1 // pred_fallthru
      _
    // Predicated region
    $region6: #{tpu_custom_call.1} parent=1 // pred_check
      _
    $region7: #{tpu_custom_call.1} parent=1 // pred_check_branch
      %30 = sbr.rel (0) target = $region9
    $region8: #{tpu_custom_call.1} parent=1 // pred_region
      %s31 = sadd.s32 0, 0
      %s32 = smul.u32 2, %s31
      %s34 = ssub.s32 256, 256
      %35 = vsyncadd [#allocation6], %s34
      %s36 = smul.addr %s32, 128
      %s37 = scalar_lea.hbm %s1, %s36
      %s38 = sshll.u32 [#allocation5], 4
      %s39 = int_to_ptr.vmem [resolvable:$true] %s38
      %44 = dma.hbm_to_vmem [thread:$0]  %s37, 256, %s39, [#allocation6], 128, 128, 8
    $region9: #{tpu_custom_call.1} parent=1 // pred_fallthru
      _
    // Predicated region
    $region10: #{tpu_custom_call.1} parent=1 // pred_check
      _
    $region11: #{tpu_custom_call.1} parent=1 // pred_check_branch
      %46 = sbr.rel (0) target = $region13
    $region12: #{tpu_custom_call.1} parent=1 // pred_region
      %s47 = sadd.s32 0, 0
      %s48 = smul.u32 2, %s47
      %s50 = ssub.s32 256, 256
      %51 = vsyncadd [#allocation6], %s50
      %s52 = smul.addr %s48, 128
      %s53 = scalar_lea.hbm %s2, %s52
      %s54 = sshll.u32 [#allocation7], 4
      %s55 = int_to_ptr.vmem [resolvable:$true] %s54
      %60 = dma.hbm_to_vmem [thread:$0]  %s53, 256, %s55, [#allocation6], 128, 128, 8
    $region13: #{tpu_custom_call.1} parent=1 // pred_fallthru
      _
    // Predicated region
    $region14: #{tpu_custom_call.1} parent=1 // pred_check
      _
    $region15: #{tpu_custom_call.1} parent=1 // pred_check_branch
      %62 = sbr.rel (0) target = $region17
    $region16: #{tpu_custom_call.1} parent=1 // pred_region
      %s63 = sadd.s32 0, 0
      %s64 = smul.u32 2, %s63
      %s66 = ssub.s32 256, 256
      %67 = vsyncadd [#allocation9], %s66
      %s68 = smul.addr %s64, 128
      %s69 = scalar_lea.hbm %s3, %s68
      %s70 = sshll.u32 [#allocation8], 4
      %s71 = int_to_ptr.vmem [resolvable:$true] %s70
      %76 = dma.hbm_to_vmem [thread:$0]  %s69, 256, %s71, [#allocation9], 128, 128, 8
    $region17: #{tpu_custom_call.1} parent=1 // pred_fallthru
      _
    // Predicated region
    $region18: #{tpu_custom_call.1} parent=1 // pred_check
      _
    $region19: #{tpu_custom_call.1} parent=1 // pred_check_branch
      %78 = sbr.rel (0) target = $region21
    $region20: #{tpu_custom_call.1} parent=1 // pred_region
      %79 = dma.done [#allocation3], 256
    $region21: #{tpu_custom_call.1} parent=1 // pred_fallthru
      _
    // Predicated region
    $region22: #{tpu_custom_call.1} parent=1 // pred_check
      _
    $region23: #{tpu_custom_call.1} parent=1 // pred_check_branch
      %81 = sbr.rel (0) target = $region25
    $region24: #{tpu_custom_call.1} parent=1 // pred_region
      %82 = dma.done [#allocation6], 256
    $region25: #{tpu_custom_call.1} parent=1 // pred_fallthru
      _
    // Predicated region
    $region26: #{tpu_custom_call.1} parent=1 // pred_check
      _
    $region27: #{tpu_custom_call.1} parent=1 // pred_check_branch
      %84 = sbr.rel (0) target = $region29
    $region28: #{tpu_custom_call.1} parent=1 // pred_region
      %85 = dma.done [#allocation6], 256
    $region29: #{tpu_custom_call.1} parent=1 // pred_fallthru
      _
    // Predicated region
    $region30: #{tpu_custom_call.1} parent=1 // pred_check
      _
    $region31: #{tpu_custom_call.1} parent=1 // pred_check_branch
      %87 = sbr.rel (0) target = $region33
    $region32: #{tpu_custom_call.1} parent=1 // pred_region
      %88 = dma.done [#allocation9], 256
    $region33: #{tpu_custom_call.1} parent=1 // pred_fallthru
      _
    %s89 = sadd.s32 0, 0
    %s90 = smul.u32 2, %s89
    %s91 = sadd.s32 0, 0
    %s92 = smul.u32 2, %s91
    %s93 = sadd.s32 0, 0
    %s94 = smul.u32 2, %s93
    %s95 = sadd.s32 0, 0
    %s96 = smul.u32 2, %s95
    %p97 = scmp.eq.s32.totalorder 0, 0
    // Predicated region
    $region34: #{tpu_custom_call.1} parent=1 // pred_check
      %p98 = pneg %p97
    $region35: #{tpu_custom_call.1} parent=1 // pred_check_branch
      %100 = sbr.rel (%p98) target = $region37
    $region36: #{tpu_custom_call.1} parent=1 // pred_region
      %101 = vst [vmem:[#allocation10] sm:$0xff] 0.0
    $region37: #{tpu_custom_call.1} parent=1 // pred_fallthru
      _
    %v102 = vld [vmem:[#allocation2] sm:$0xff]
    %v103 = vld [vmem:[#allocation2 + $0x8] sm:$0xff]
    %v104 = vld [vmem:[#allocation5] sm:$0xff]
    %v105 = vld [vmem:[#allocation5 + $0x8] sm:$0xff]
    %v106 = vadd.f32 %v102, %v104
    %v107 = vadd.f32 %v103, %v105
    %v108 = vld [vmem:[#allocation7] sm:$0xff]
    %v109 = vld [vmem:[#allocation7 + $0x8] sm:$0xff]
    %v110 = vadd.f32 %v106, %v108
    %v111 = vadd.f32 %v107, %v109
    %v112 = vld [vmem:[#allocation8] sm:$0xff]
    %v113 = vld [vmem:[#allocation8 + $0x8] sm:$0xff]
    %v114 = vadd.f32 %v110, %v112
    %v115 = vadd.f32 %v111, %v113
    %v116 = vld [vmem:[#allocation10] sm:$0x1]
    %v117 = vadd.f32 %v114, %v115
    %v118 = vrot.slane %v117, 4
    %v119 = vadd.f32 %v117, %v118
    %v120 = vrot.slane %v119, 2
    %v121 = vadd.f32 %v119, %v120
    %v122 = vrot.slane %v121, 1
    %v123 = vadd.f32 %v121, %v122
    %v124 = vadd.f32 %v116, %v123
    %125 = vst [vmem:[#allocation10] sm:$0x1] %v124
    // Predicated region
    $region38: #{tpu_custom_call.1} parent=1 // pred_check
      _
    $region39: #{tpu_custom_call.1} parent=1 // pred_check_branch
      %127 = sbr.rel (0) target = $region41
    $region40: #{tpu_custom_call.1} parent=1 // pred_region
      %s129 = ssub.s32 128, 128
      %130 = vsyncadd [#allocation4], %s129
      %s132 = sshll.u32 [#allocation10], 4
      %s133 = int_to_ptr.vmem [resolvable:$true] %s132
      %135 = dma.vmem_to_hbm [thread:$0]  %s133, 128, %s4, [#allocation4]
    $region41: #{tpu_custom_call.1} parent=1 // pred_fallthru
      _
    // Predicated region
    $region42: #{tpu_custom_call.1} parent=1 // pred_check
      _
    $region43: #{tpu_custom_call.1} parent=1 // pred_check_branch
      %137 = sbr.rel (0) target = $region45
    $region44: #{tpu_custom_call.1} parent=1 // pred_region
      %138 = dma.done [#allocation4], 128
    $region45: #{tpu_custom_call.1} parent=1 // pred_fallthru
      _
    %139 = vsyncpa [#allocation3], 1
    %140 = vsyncpa [#allocation6], 1
    %141 = vsyncpa [#allocation9], 1
    %142 = vsyncpa [#allocation4], 1

</llo_original>
